<compile_context>
chip_gen: v7x
topology: tpu7x:2x2x1
jax: 0.10.0
libtpu: 0.0.40
codegen_flags: <defaults>
</compile_context>

<pallas_src>
import jax
import jax.numpy as jnp
from jax import lax
from jax.experimental import pallas as pl
from jax.experimental.pallas import tpu as pltpu


def _round_up(n, m):
    return ((n + m - 1) // m) * m


def dqn_kernel(x_ref, w1_ref, b1_ref, w2_ref, b2_ref, w3t_ref, b3_ref, o_ref):
    # In-kernel cast of x to bf16 (free under MXU/DMA slack; x arrives f32).
    x = x_ref[...].astype(jnp.bfloat16)

    # fc1 + ReLU   (bf16 x bf16 -> f32 accumulate, f32 bias)
    h1 = jnp.dot(x, w1_ref[...], preferred_element_type=jnp.float32)
    h1 = jnp.maximum(h1 + b1_ref[...], 0.0)

    # fc2 + ReLU
    h2 = jnp.dot(h1.astype(jnp.bfloat16), w2_ref[...],
                 preferred_element_type=jnp.float32)
    h2 = jnp.maximum(h2 + b2_ref[...], 0.0)

    # fc3, emitted transposed:  w3t (out_pad, 64) x h2 (TB, 64) contracted over
    # the 64-feature dim -> (out_pad, TB).  Output writeback is sublane-padded
    # (8 rows) and lane-dense (TB multiple of 128 / full array), not 128-lane
    # padded -> ~16x fewer HBM store bytes than the (TB, 128) layout.
    out_t = lax.dot_general(
        w3t_ref[...], h2.astype(jnp.bfloat16),
        dimension_numbers=(((1,), (1,)), ((), ())),
        preferred_element_type=jnp.float32)
    o_ref[...] = (out_t + b3_ref[...]).astype(o_ref.dtype)


def prepare_params(params):
    """One-time param prep (hoisted out of the per-call path).

    Returns VMEM-ready tensors:
      w1, w2 as bf16 (in, out); w3 transposed + sublane-padded to (out_pad, 64)
      bf16; biases f32, b3 as an (out_pad, 1) column for the transposed output.
    """
    w1, b1, w2, b2, w3, b3 = params
    out_dim = w3.shape[1]
    out_pad = _round_up(max(out_dim, 8), 8)          # sublane padding only

    w3t = jnp.zeros((out_pad, w3.shape[0]), jnp.bfloat16)
    w3t = w3t.at[:out_dim, :].set(w3.T.astype(jnp.bfloat16))
    b3c = jnp.zeros((out_pad, 1), jnp.float32)
    b3c = b3c.at[:out_dim, 0].set(b3.reshape(-1).astype(jnp.float32))

    return {
        "w1": w1.astype(jnp.bfloat16),
        "b1": b1.astype(jnp.float32).reshape(1, -1),
        "w2": w2.astype(jnp.bfloat16),
        "b2": b2.astype(jnp.float32).reshape(1, -1),
        "w3t": w3t,
        "b3": b3c,
        "out_dim": out_dim,   # static python int
    }


def dqn_forward(x, prepped, *, max_batch_tile=1024):
    """Fused DQN forward. x: (B, input_dim) f32. Returns (B, output_dim) f32."""
    w1b, b1 = prepped["w1"], prepped["b1"]
    w2b, b2 = prepped["w2"], prepped["b2"]
    w3t, b3c = prepped["w3t"], prepped["b3"]
    out_dim = prepped["out_dim"]

    B, in_dim = x.shape
    h1_dim = w1b.shape[1]
    h2_dim = w2b.shape[1]
    out_pad = w3t.shape[0]

    # --- batch tiling -------------------------------------------------------
    if B <= max_batch_tile:
        TB = _round_up(B, 8)          # single step; block == full (padded) array
        n_steps = 1
    else:
        n_steps = pl.cdiv(B, _round_up(max_batch_tile, 128))
        if n_steps % 2 == 1:
            n_steps += 1              # even grid -> balanced over v7x's 2 TCs
        TB = _round_up(pl.cdiv(B, n_steps), 128)   # lane-dense (8, TB) out tiles
    B_pad = TB * n_steps
    if B_pad != B:
        x = jnp.pad(x, ((0, B_pad - B), (0, 0)))

    grid = (n_steps,)

    flops = 2 * B_pad * (in_dim * h1_dim + h1_dim * h2_dim + h2_dim * out_pad)
    bytes_accessed = (B_pad * in_dim * 4                    # x read (f32)
                      + (w1b.size + w2b.size + w3t.size) * 2  # bf16 weights
                      + (b1.size + b2.size + b3c.size) * 4    # f32 biases
                      + out_pad * B_pad * 4)                  # transposed f32 out

    resident = lambda shape: pl.BlockSpec(shape, lambda i: (0,) * len(shape))

    out_t = pl.pallas_call(
        dqn_kernel,
        out_shape=jax.ShapeDtypeStruct((out_pad, B_pad), jnp.float32),
        grid=grid,
        in_specs=[
            pl.BlockSpec((TB, in_dim), lambda i: (i, 0)),   # batch-tiled x
            resident(w1b.shape), resident(b1.shape),        # VMEM-resident params
            resident(w2b.shape), resident(b2.shape),
            resident(w3t.shape), resident(b3c.shape),
        ],
        out_specs=pl.BlockSpec((out_pad, TB), lambda i: (0, i)),
        compiler_params=pltpu.CompilerParams(
            dimension_semantics=("parallel",)),
        cost_estimate=pl.CostEstimate(
            flops=flops, transcendentals=0, bytes_accessed=bytes_accessed),
    )(x, w1b, b1, w2b, b2, w3t, b3c)

    # Undo the transposed/padded layout (tiny: out_dim x B elements).
    return out_t[:out_dim, :B].T


def init_params(key, input_dim, output_dim):
    # Deterministic synthetic init mirroring nn.Linear shapes
    # (uniform in +-1/sqrt(fan_in), like PyTorch's default), stored (in, out).
    dims = [(input_dim, 128), (128, 64), (64, output_dim)]
    params = []
    keys = jax.random.split(key, 2 * len(dims))
    for i, (fan_in, fan_out) in enumerate(dims):
        bound = 1.0 / jnp.sqrt(fan_in)
        w = jax.random.uniform(keys[2 * i], (fan_in, fan_out),
                               minval=-bound, maxval=bound, dtype=jnp.float32)
        b = jax.random.uniform(keys[2 * i + 1], (1, fan_out),
                               minval=-bound, maxval=bound, dtype=jnp.float32)
        params += [w, b]
    return tuple(params)


def ref_forward_bf16(x, params):
    # Pure-JAX reference with the same bf16 matmul / f32 accumulation scheme.
    w1, b1, w2, b2, w3, b3 = params
    h = jnp.dot(x.astype(jnp.bfloat16), w1.astype(jnp.bfloat16),
                preferred_element_type=jnp.float32) + b1
    h = jnp.maximum(h, 0.0)
    h = jnp.dot(h.astype(jnp.bfloat16), w2.astype(jnp.bfloat16),
                preferred_element_type=jnp.float32) + b2
    h = jnp.maximum(h, 0.0)
    return jnp.dot(h.astype(jnp.bfloat16), w3.astype(jnp.bfloat16),
                   preferred_element_type=jnp.float32) + b3


if __name__ == "__main__":
    # NOTE: at B=2 this call is pure launch overhead; the kernel pays off at
    # replay-buffer batch sizes (256-4096), which the batch grid is sized for.
    input_dim, output_dim, batch = 8, 4, 2
    key = jax.random.PRNGKey(0)
    k_x, k_p = jax.random.split(key)

    x = jax.random.normal(k_x, (batch, input_dim), dtype=jnp.float32)
    params = init_params(k_p, input_dim, output_dim)
    prepped = prepare_params(params)   # hoisted: done once, reused every forward

    out = dqn_forward(x, prepped)
    jax.block_until_ready(out)
    assert out.shape == (batch, output_dim)

    # Match-precision reference check (bf16 matmuls, f32 accumulation)
    ref = ref_forward_bf16(x, params)
    assert jnp.allclose(out, ref, atol=1e-3), "mismatch vs bf16 reference"

    # Loose sanity check vs full-f32 PyTorch-semantics forward
    w1, b1, w2, b2, w3, b3 = params
    ref_f32 = jnp.maximum(x @ w1 + b1, 0.0)
    ref_f32 = jnp.maximum(ref_f32 @ w2 + b2, 0.0)
    ref_f32 = ref_f32 @ w3 + b3
    assert jnp.allclose(out, ref_f32, atol=5e-2), "mismatch vs f32 reference"

    # Exercise the multi-step (even, 128-aligned) grid path with a ragged batch.
    x_big = jax.random.normal(k_x, (300, input_dim), dtype=jnp.float32)
    out_big = dqn_forward(x_big, prepped, max_batch_tile=128)
    jax.block_until_ready(out_big)
    assert out_big.shape == (300, output_dim)
    ref_big = ref_forward_bf16(x_big, params)
    assert jnp.allclose(out_big, ref_big, atol=1e-3), "mismatch on tiled batch"

    print("KERNEL_OK")
</pallas_src>

<mosaic_0001>
module attributes {stable_mosaic.version = 11 : i64} {
  func.func @dqn_kernel(%arg0: i32, %arg1: memref<8x8xf32, #tpu.memory_space<vmem>>, %arg2: memref<8x128xbf16, #tpu.memory_space<vmem>>, %arg3: memref<1x128xf32, #tpu.memory_space<vmem>>, %arg4: memref<128x64xbf16, #tpu.memory_space<vmem>>, %arg5: memref<1x64xf32, #tpu.memory_space<vmem>>, %arg6: memref<8x64xbf16, #tpu.memory_space<vmem>>, %arg7: memref<8x1xf32, #tpu.memory_space<vmem>>, %arg8: memref<8x8xf32, #tpu.memory_space<vmem>>) attributes {dimension_semantics = [#tpu.dimension_semantics<parallel>], iteration_bounds = array<i64: 1>, scalar_prefetch = 0 : i64, scratch_operands = 0 : i64, tpu.core_type = #tpu.core_type<tc>, window_params = [{transform_indices = @transform_0, window_bounds = array<i64: 8, 8>}, {pipeline_mode = #tpu.pipeline_mode<synchronous>, transform_indices = @transform_1, window_bounds = array<i64: 8, 128>}, {pipeline_mode = #tpu.pipeline_mode<synchronous>, transform_indices = @transform_2, window_bounds = array<i64: 1, 128>}, {pipeline_mode = #tpu.pipeline_mode<synchronous>, transform_indices = @transform_3, window_bounds = array<i64: 128, 64>}, {pipeline_mode = #tpu.pipeline_mode<synchronous>, transform_indices = @transform_4, window_bounds = array<i64: 1, 64>}, {pipeline_mode = #tpu.pipeline_mode<synchronous>, transform_indices = @transform_5, window_bounds = array<i64: 8, 64>}, {pipeline_mode = #tpu.pipeline_mode<synchronous>, transform_indices = @transform_6, window_bounds = array<i64: 8, 1>}, {transform_indices = @transform_7, window_bounds = array<i64: 8, 8>}]} {
    %c0 = arith.constant 0 : index
    %c0_0 = arith.constant 0 : index
    %0 = vector.load %arg1[%c0, %c0_0] : memref<8x8xf32, #tpu.memory_space<vmem>>, vector<8x8xf32>
    %1 = arith.truncf %0 : vector<8x8xf32> to vector<8x8xbf16>
    %c0_1 = arith.constant 0 : index
    %c0_2 = arith.constant 0 : index
    %2 = vector.load %arg2[%c0_1, %c0_2] : memref<8x128xbf16, #tpu.memory_space<vmem>>, vector<8x128xbf16>
    %cst = arith.constant dense<0.000000e+00> : vector<8x128xf32>
    %3 = tpu.matmul %1, %2, %cst {dimension_numbers = #tpu.dot_dimension_numbers<[1], [0], [0], [1], [0, 0, 1, 1], [], []>} : vector<8x8xbf16>, vector<8x128xbf16>, vector<8x128xf32> -> vector<8x128xf32>
    %c0_3 = arith.constant 0 : index
    %c0_4 = arith.constant 0 : index
    %4 = vector.load %arg3[%c0_3, %c0_4] : memref<1x128xf32, #tpu.memory_space<vmem>>, vector<1x128xf32>
    %5 = vector.broadcast %4 : vector<1x128xf32> to vector<8x128xf32>
    %6 = arith.addf %3, %5 : vector<8x128xf32>
    %cst_5 = arith.constant 0.000000e+00 : f32
    %7 = vector.broadcast %cst_5 : f32 to vector<8x128xf32>
    %8 = arith.maximumf %6, %7 : vector<8x128xf32>
    %9 = arith.truncf %8 : vector<8x128xf32> to vector<8x128xbf16>
    %c0_6 = arith.constant 0 : index
    %c0_7 = arith.constant 0 : index
    %10 = vector.load %arg4[%c0_6, %c0_7] : memref<128x64xbf16, #tpu.memory_space<vmem>>, vector<128x64xbf16>
    %cst_8 = arith.constant dense<0.000000e+00> : vector<8x64xf32>
    %11 = tpu.matmul %9, %10, %cst_8 {dimension_numbers = #tpu.dot_dimension_numbers<[1], [0], [0], [1], [0, 0, 1, 1], [], []>} : vector<8x128xbf16>, vector<128x64xbf16>, vector<8x64xf32> -> vector<8x64xf32>
    %c0_9 = arith.constant 0 : index
    %c0_10 = arith.constant 0 : index
    %12 = vector.load %arg5[%c0_9, %c0_10] : memref<1x64xf32, #tpu.memory_space<vmem>>, vector<1x64xf32>
    %13 = vector.broadcast %12 : vector<1x64xf32> to vector<8x64xf32>
    %14 = arith.addf %11, %13 : vector<8x64xf32>
    %cst_11 = arith.constant 0.000000e+00 : f32
    %15 = vector.broadcast %cst_11 : f32 to vector<8x64xf32>
    %16 = arith.maximumf %14, %15 : vector<8x64xf32>
    %c0_12 = arith.constant 0 : index
    %c0_13 = arith.constant 0 : index
    %17 = vector.load %arg6[%c0_12, %c0_13] : memref<8x64xbf16, #tpu.memory_space<vmem>>, vector<8x64xbf16>
    %18 = arith.truncf %16 : vector<8x64xf32> to vector<8x64xbf16>
    %cst_14 = arith.constant dense<0.000000e+00> : vector<8x8xf32>
    %19 = tpu.matmul %17, %18, %cst_14 {dimension_numbers = #tpu.dot_dimension_numbers<[1], [1], [0], [0], [0, 0, 1, 0], [], []>} : vector<8x64xbf16>, vector<8x64xbf16>, vector<8x8xf32> -> vector<8x8xf32>
    %c0_15 = arith.constant 0 : index
    %c0_16 = arith.constant 0 : index
    %20 = vector.load %arg7[%c0_15, %c0_16] : memref<8x1xf32, #tpu.memory_space<vmem>>, vector<8x1xf32>
    %21 = vector.broadcast %20 : vector<8x1xf32> to vector<8x8xf32>
    %22 = arith.addf %19, %21 : vector<8x8xf32>
    %c0_17 = arith.constant 0 : index
    %c0_18 = arith.constant 0 : index
    %23 = vector.load %arg8[%c0_17, %c0_18] : memref<8x8xf32, #tpu.memory_space<vmem>>, vector<8x8xf32>
    tpu.vector_store %arg8[%c0_17, %c0_18], %22 {strides = array<i32>} : memref<8x8xf32, #tpu.memory_space<vmem>>, vector<8x8xf32>,
    return
  }
  func.func @transform_0(%arg0: i32) -> (i32, i32) {
    %c0_i32 = arith.constant 0 : i32
    %c0_i32_0 = arith.constant 0 : i32
    return %arg0, %c0_i32 : i32, i32
  }
  func.func @transform_1(%arg0: i32) -> (i32, i32) {
    %c0_i32 = arith.constant 0 : i32
    %c0_i32_0 = arith.constant 0 : i32
    %c0_i32_1 = arith.constant 0 : i32
    return %c0_i32, %c0_i32_0 : i32, i32
  }
  func.func @transform_2(%arg0: i32) -> (i32, i32) {
    %c0_i32 = arith.constant 0 : i32
    %c0_i32_0 = arith.constant 0 : i32
    %c0_i32_1 = arith.constant 0 : i32
    return %c0_i32, %c0_i32_0 : i32, i32
  }
  func.func @transform_3(%arg0: i32) -> (i32, i32) {
    %c0_i32 = arith.constant 0 : i32
    %c0_i32_0 = arith.constant 0 : i32
    %c0_i32_1 = arith.constant 0 : i32
    return %c0_i32, %c0_i32_0 : i32, i32
  }
  func.func @transform_4(%arg0: i32) -> (i32, i32) {
    %c0_i32 = arith.constant 0 : i32
    %c0_i32_0 = arith.constant 0 : i32
    %c0_i32_1 = arith.constant 0 : i32
    return %c0_i32, %c0_i32_0 : i32, i32
  }
  func.func @transform_5(%arg0: i32) -> (i32, i32) {
    %c0_i32 = arith.constant 0 : i32
    %c0_i32_0 = arith.constant 0 : i32
    %c0_i32_1 = arith.constant 0 : i32
    return %c0_i32, %c0_i32_0 : i32, i32
  }
  func.func @transform_6(%arg0: i32) -> (i32, i32) {
    %c0_i32 = arith.constant 0 : i32
    %c0_i32_0 = arith.constant 0 : i32
    %c0_i32_1 = arith.constant 0 : i32
    return %c0_i32, %c0_i32_0 : i32, i32
  }
  func.func @transform_7(%arg0: i32) -> (i32, i32) {
    %c0_i32 = arith.constant 0 : i32
    %c0_i32_0 = arith.constant 0 : i32
    return %c0_i32, %arg0 : i32, i32
  }
}

</mosaic_0001>

<llo_original>
// kernel: tpu_custom_call.1
$region0: #{tpu_custom_call.1}
  #allocation0 [shape = 'u32[]', space=smem, size = 0x4, offset = 0x4, fixed_abs, tag = 'smem constant byte address 0x4 - core index']
  #allocation1 [shape = 'u32[144,128]{1,0:T(1,128)}', space=vmem, size = 0x12000, scoped, tag = 'internal scratch']
  %s0 = inlined_call_operand.vmem [shape: f32[8,8], index: 0, kind: input, shape index: {}]
  %s1 = inlined_call_operand.vmem [shape: bf16[8,128], index: 1, kind: input, shape index: {}]
  %s2 = inlined_call_operand.vmem [shape: f32[1,128], index: 2, kind: input, shape index: {}]
  %s3 = inlined_call_operand.vmem [shape: bf16[128,64], index: 3, kind: input, shape index: {}]
  %s4 = inlined_call_operand.vmem [shape: f32[1,64], index: 4, kind: input, shape index: {}]
  %s5 = inlined_call_operand.vmem [shape: bf16[8,64], index: 5, kind: input, shape index: {}]
  %s6 = inlined_call_operand.vmem [shape: f32[8,1], index: 6, kind: input, shape index: {}]
  %s7 = inlined_call_operand.hbm [shape: f32[8,8], index: 7, kind: output, shape index: {}]
  %s8 = sld [smem:[#allocation0]]
  $region38: #{tpu_custom_call.1} parent=0
    _
  %s10 = ssub.s32 1, %s8
  %s11 = scalar_select 0, %s10, %s8
  $region1: #{tpu_custom_call.1} parent=0
    #allocation2 [shape = 'u8[4096]{0}', space=vmem, size = 0x1000, scoped, tag = 'output window, operand 0, single buffered']
    #allocation3 [shape = 's32[1]{0}', space=sflag, size = 0x4, scoped, tag = 'scoped memory for tpu_custom_call.1']
    %12 = vsyncpa [#allocation3], 0
    // Predicated region
    $region2: #{tpu_custom_call.1} parent=1 // pred_check
      _
    $region3: #{tpu_custom_call.1} parent=1 // pred_check_branch
      %14 = sbr.rel (0) target = $region5
    $region4: #{tpu_custom_call.1} parent=1 // pred_region
      _
    $region5: #{tpu_custom_call.1} parent=1 // pred_fallthru
      _
    // Predicated region
    $region6: #{tpu_custom_call.1} parent=1 // pred_check
      _
    $region7: #{tpu_custom_call.1} parent=1 // pred_check_branch
      %16 = sbr.rel (0) target = $region9
    $region8: #{tpu_custom_call.1} parent=1 // pred_region
      _
    $region9: #{tpu_custom_call.1} parent=1 // pred_fallthru
      _
    // Predicated region
    $region10: #{tpu_custom_call.1} parent=1 // pred_check
      _
    $region11: #{tpu_custom_call.1} parent=1 // pred_check_branch
      %18 = sbr.rel (0) target = $region13
    $region12: #{tpu_custom_call.1} parent=1 // pred_region
      _
    $region13: #{tpu_custom_call.1} parent=1 // pred_fallthru
      _
    // Predicated region
    $region14: #{tpu_custom_call.1} parent=1 // pred_check
      _
    $region15: #{tpu_custom_call.1} parent=1 // pred_check_branch
      %20 = sbr.rel (0) target = $region17
    $region16: #{tpu_custom_call.1} parent=1 // pred_region
      _
    $region17: #{tpu_custom_call.1} parent=1 // pred_fallthru
      _
    // Predicated region
    $region18: #{tpu_custom_call.1} parent=1 // pred_check
      _
    $region19: #{tpu_custom_call.1} parent=1 // pred_check_branch
      %22 = sbr.rel (0) target = $region21
    $region20: #{tpu_custom_call.1} parent=1 // pred_region
      _
    $region21: #{tpu_custom_call.1} parent=1 // pred_fallthru
      _
    // Predicated region
    $region22: #{tpu_custom_call.1} parent=1 // pred_check
      _
    $region23: #{tpu_custom_call.1} parent=1 // pred_check_branch
      %24 = sbr.rel (0) target = $region25
    $region24: #{tpu_custom_call.1} parent=1 // pred_region
      _
    $region25: #{tpu_custom_call.1} parent=1 // pred_fallthru
      _
    // Predicated region
    $region26: #{tpu_custom_call.1} parent=1 // pred_check
      _
    $region27: #{tpu_custom_call.1} parent=1 // pred_check_branch
      %26 = sbr.rel (0) target = $region29
    $region28: #{tpu_custom_call.1} parent=1 // pred_region
      _
    $region29: #{tpu_custom_call.1} parent=1 // pred_fallthru
      _
    %v28 = vld [vmem:[%s0] sm:$0xff]
    %v29 = vpack.c.bf16 %v28, %v28
    %v30 = vld [vmem:[%s1] sm:$0xf]
    %v31 = vld [vmem:[%s2] sm:$0x1]
    %v33 = vlaneseq
    %v34 = vshrl.u32 %v33, 7
    %v35 = vsub.s32 0, %v34
    %v36 = vrot.slane %v31, %v35
    %vm38 = vcmask 64512
    %v40 = vsel %vm38, %v29, 0
    %vm42 = vcmask 1043456
    %v44 = vsel %vm42, %v30, 0
    %46 = vmatprep.subr.bf16.mxu0 0
    %47 = vmatpush1.bf16.msra.mxu0 %v44
    %48 = vmatprep.subr.bf16.mxu0 0
    %49 = vmatpush1.bf16.msra.mxu0 0
    %50 = vmatprep.subr.bf16.mxu0 0
    %51 = vmatpush1.bf16.msra.mxu0 0
    %52 = vmatprep.subr.bf16.mxu0 0
    %53 = vmatpush1.bf16.msra.mxu0 0
    %54 = vmatprep.subr.bf16.mxu0 0
    %55 = vmatpush1.bf16.msra.mxu0 0
    %56 = vmatprep.subr.bf16.mxu0 0
    %57 = vmatpush1.bf16.msra.mxu0 0
    %58 = vmatprep.subr.bf16.mxu0 0
    %59 = vmatpush1.bf16.msra.mxu0 0
    %60 = vmatprep.subr.bf16.mxu0 0
    %61 = vmatpush1.bf16.msra.mxu0 0
    %62 = vmatprep.subr.bf16.mxu0 0
    %63 = vmatpush1.bf16.msra.mxu0 0
    %64 = vmatprep.subr.bf16.mxu0 0
    %65 = vmatpush1.bf16.msra.mxu0 0
    %66 = vmatprep.subr.bf16.mxu0 0
    %67 = vmatpush1.bf16.msra.mxu0 0
    %68 = vmatprep.subr.bf16.mxu0 0
    %69 = vmatpush1.bf16.msra.mxu0 0
    %70 = vmatprep.subr.bf16.mxu0 0
    %71 = vmatpush1.bf16.msra.mxu0 0
    %72 = vmatprep.subr.bf16.mxu0 0
    %73 = vmatpush1.bf16.msra.mxu0 0
    %74 = vmatprep.subr.bf16.mxu0 0
    %75 = vmatpush1.bf16.msra.mxu0 0
    %76 = vmatprep.subr.bf16.mxu0 0
    %77 = vmatpush1.bf16.msra.mxu0 0
    %78 = vmatprep.mubr.bf16.mxu0 0
    %79 = vmatmul.mubr.bf16.gmra.mrb[0].mxu0 %v40
    %v80 = vpop.f32.mrb[0].mxu0
    %v81 = vadd.f32 %v36, %v80
    %v82 = vpop.f32.mrb[0].mxu0
    %v83 = vpop.f32.mrb[0].mxu0
    %v84 = vpop.f32.mrb[0].mxu0
    %85 = vdwg.mxu0
    %v86 = vmax.f32 %v81, 0.0
    %v87 = vpack.c.bf16 %v86, %v86
    %v88 = vld [vmem:[%s3] sm:$0xf]
    %v89 = vld [vmem:[%s3 + $0x4] sm:$0xf]
    %v90 = vld [vmem:[%s3 + $0x8] sm:$0xf]
    %v91 = vld [vmem:[%s3 + $0xc] sm:$0xf]
    %v92 = vld [vmem:[%s3 + $0x10] sm:$0xf]
    %v93 = vld [vmem:[%s3 + $0x14] sm:$0xf]
    %v94 = vld [vmem:[%s3 + $0x18] sm:$0xf]
    %v95 = vld [vmem:[%s3 + $0x1c] sm:$0xf]
    %v96 = vld [vmem:[%s3 + $0x20] sm:$0xf]
    %v97 = vld [vmem:[%s3 + $0x24] sm:$0xf]
    %v98 = vld [vmem:[%s3 + $0x28] sm:$0xf]
    %v99 = vld [vmem:[%s3 + $0x2c] sm:$0xf]
    %v100 = vld [vmem:[%s3 + $0x30] sm:$0xf]
    %v101 = vld [vmem:[%s3 + $0x34] sm:$0xf]
    %v102 = vld [vmem:[%s3 + $0x38] sm:$0xf]
    %v103 = vld [vmem:[%s3 + $0x3c] sm:$0xf]
    %v104 = vld [vmem:[%s4] sm:$0x1]
    %v106 = vlaneseq
    %v107 = vshrl.u32 %v106, 7
    %v108 = vsub.s32 0, %v107
    %v109 = vrot.slane %v104, %v108
    %v127 = vunpack.c.l.b16 %v88
    %v128 = vunpack.c.l.b16 %v89
    %v129 = vunpack.c.l.b16 %v90
    %v130 = vunpack.c.l.b16 %v91
    %v131 = vunpack.c.l.b16 %v92
    %v132 = vunpack.c.l.b16 %v93
    %v133 = vunpack.c.l.b16 %v94
    %v134 = vunpack.c.l.b16 %v95
    %v135 = vunpack.c.l.b16 %v96
    %v136 = vunpack.c.l.b16 %v97
    %v137 = vunpack.c.l.b16 %v98
    %v138 = vunpack.c.l.b16 %v99
    %v139 = vunpack.c.l.b16 %v100
    %v140 = vunpack.c.l.b16 %v101
    %v141 = vunpack.c.l.b16 %v102
    %v142 = vunpack.c.l.b16 %v103
    %v143 = vpack.c.b16 %v128, %v127
    %v144 = vpack.c.b16 %v130, %v129
    %v145 = vpack.c.b16 %v132, %v131
    %v146 = vpack.c.b16 %v134, %v133
    %v147 = vpack.c.b16 %v136, %v135
    %v148 = vpack.c.b16 %v138, %v137
    %v149 = vpack.c.b16 %v140, %v139
    %v150 = vpack.c.b16 %v142, %v141
    %159 = vmatprep.subr.bf16.mxu0 0
    %160 = vmatpush1.bf16.msra.mxu0 %v143
    %161 = vmatprep.subr.bf16.mxu0 0
    %162 = vmatpush1.bf16.msra.mxu0 %v144
    %163 = vmatprep.subr.bf16.mxu0 0
    %164 = vmatpush1.bf16.msra.mxu0 %v145
    %165 = vmatprep.subr.bf16.mxu0 0
    %166 = vmatpush1.bf16.msra.mxu0 %v146
    %167 = vmatprep.subr.bf16.mxu0 0
    %168 = vmatpush1.bf16.msra.mxu0 %v147
    %169 = vmatprep.subr.bf16.mxu0 0
    %170 = vmatpush1.bf16.msra.mxu0 %v148
    %171 = vmatprep.subr.bf16.mxu0 0
    %172 = vmatpush1.bf16.msra.mxu0 %v149
    %173 = vmatprep.subr.bf16.mxu0 0
    %174 = vmatpush1.bf16.msra.mxu0 %v150
    %175 = vmatprep.subr.bf16.mxu0 0
    %176 = vmatpush1.bf16.msra.mxu0 0
    %177 = vmatprep.subr.bf16.mxu0 0
    %178 = vmatpush1.bf16.msra.mxu0 0
    %179 = vmatprep.subr.bf16.mxu0 0
    %180 = vmatpush1.bf16.msra.mxu0 0
    %181 = vmatprep.subr.bf16.mxu0 0
    %182 = vmatpush1.bf16.msra.mxu0 0
    %183 = vmatprep.subr.bf16.mxu0 0
    %184 = vmatpush1.bf16.msra.mxu0 0
    %185 = vmatprep.subr.bf16.mxu0 0
    %186 = vmatpush1.bf16.msra.mxu0 0
    %187 = vmatprep.subr.bf16.mxu0 0
    %188 = vmatpush1.bf16.msra.mxu0 0
    %189 = vmatprep.subr.bf16.mxu0 0
    %190 = vmatpush1.bf16.msra.mxu0 0
    %191 = vmatprep.mubr.bf16.mxu0 0
    %192 = vmatmul.mubr.bf16.gmra.mrb[0].mxu0 %v87
    %v193 = vpop.f32.mrb[0].mxu0
    %v194 = vadd.f32 %v109, %v193
    %v195 = vpop.f32.mrb[0].mxu0
    %v196 = vpop.f32.mrb[0].mxu0
    %v197 = vpop.f32.mrb[0].mxu0
    %198 = vdwg.mxu0
    %v199 = vmax.f32 %v194, 0.0
    %v200 = vld [vmem:[%s5] sm:$0xf]
    %v201 = vpack.c.bf16 %v199, %v199
    %v202 = vld [vmem:[%s6] sm:$0xff]
    %204 = vset.pattern.permute.xlu0 0
    %205 = vperm.xlu0 %204, %v202
    %v206 = vpop.permute.xlu0 %205
    %vm208 = vcmask 523264
    %v210 = vsel %vm208, %v200, 0
    %v213 = vsel %vm208, %v201, 0
    %215 = vmatprep.subr.bf16.mxu0 0
    %216 = vmatpush1.bf16.xpose.msra.mxu0 %v213
    %217 = vmatprep.subr.bf16.mxu0 0
    %218 = vmatpush1.bf16.xpose.msra.mxu0 0
    %219 = vmatprep.subr.bf16.mxu0 0
    %220 = vmatpush1.bf16.xpose.msra.mxu0 0
    %221 = vmatprep.subr.bf16.mxu0 0
    %222 = vmatpush1.bf16.xpose.msra.mxu0 0
    %223 = vmatprep.subr.bf16.mxu0 0
    %224 = vmatpush1.bf16.xpose.msra.mxu0 0
    %225 = vmatprep.subr.bf16.mxu0 0
    %226 = vmatpush1.bf16.xpose.msra.mxu0 0
    %227 = vmatprep.subr.bf16.mxu0 0
    %228 = vmatpush1.bf16.xpose.msra.mxu0 0
    %229 = vmatprep.subr.bf16.mxu0 0
    %230 = vmatpush1.bf16.xpose.msra.mxu0 0
    %231 = vmatprep.subr.bf16.mxu0 0
    %232 = vmatpush1.bf16.xpose.msra.mxu0 0
    %233 = vmatprep.subr.bf16.mxu0 0
    %234 = vmatpush1.bf16.xpose.msra.mxu0 0
    %235 = vmatprep.subr.bf16.mxu0 0
    %236 = vmatpush1.bf16.xpose.msra.mxu0 0
    %237 = vmatprep.subr.bf16.mxu0 0
    %238 = vmatpush1.bf16.xpose.msra.mxu0 0
    %239 = vmatprep.subr.bf16.mxu0 0
    %240 = vmatpush1.bf16.xpose.msra.mxu0 0
    %241 = vmatprep.subr.bf16.mxu0 0
    %242 = vmatpush1.bf16.xpose.msra.mxu0 0
    %243 = vmatprep.subr.bf16.mxu0 0
    %244 = vmatpush1.bf16.xpose.msra.mxu0 0
    %245 = vmatprep.subr.bf16.mxu0 0
    %246 = vmatpush1.bf16.xpose.msra.mxu0 0
    %247 = vmatprep.mubr.bf16.mxu0 0
    %248 = vmatmul.mubr.bf16.gmra.mrb[0].mxu0 %v210
    %v249 = vpop.f32.mrb[0].mxu0
    %v250 = vadd.f32 %v206, %v249
    %v251 = vpop.f32.mrb[0].mxu0
    %v252 = vpop.f32.mrb[0].mxu0
    %v253 = vpop.f32.mrb[0].mxu0
    %254 = vdwg.mxu0
    %255 = vst.msk [vmem:[#allocation2] sm:$0xff] %vm38, %v250
    // Predicated region
    $region30: #{tpu_custom_call.1} parent=1 // pred_check
      _
    $region31: #{tpu_custom_call.1} parent=1 // pred_check_branch
      %257 = sbr.rel (0) target = $region33
    $region32: #{tpu_custom_call.1} parent=1 // pred_region
      %s259 = ssub.s32 128, 128
      %260 = vsyncadd [#allocation3], %s259
      %s262 = sshll.u32 [#allocation2], 4
      %s263 = int_to_ptr.vmem [resolvable:$true] %s262
      %265 = dma.vmem_to_hbm [thread:$0]  %s263, 128, %s7, [#allocation3]
    $region33: #{tpu_custom_call.1} parent=1 // pred_fallthru
      _
    // Predicated region
    $region34: #{tpu_custom_call.1} parent=1 // pred_check
      _
    $region35: #{tpu_custom_call.1} parent=1 // pred_check_branch
      %267 = sbr.rel (0) target = $region37
    $region36: #{tpu_custom_call.1} parent=1 // pred_region
      %268 = dma.done [#allocation3], 128
    $region37: #{tpu_custom_call.1} parent=1 // pred_fallthru
      _
    %269 = vsyncpa [#allocation3], 1

</llo_original>
